<compile_context>
chip_gen: v6e
topology: v6e:2x2x1
jax: 0.10.0
libtpu: 0.0.40
codegen_flags: <defaults>
</compile_context>

<pallas_src>
import jax
import jax.numpy as jnp
from jax import lax
from jax.experimental import pallas as pl
from jax.experimental.pallas import tpu as pltpu


def make_fused_kernel(compute_dtype):
    def kernel(batch_ref, x_ref, wt_ref, out_ref):
        i = pl.program_id(2)  # node-tile index (trailing reduction axis)

        # Linear (no bias) on the MXU; cast to the MXU operand dtype *inside* the kernel
        # (VPU work hidden under DMA/MXU) instead of materializing a cast copy in HBM.
        pred = jnp.dot(x_ref[...].astype(compute_dtype),
                       wt_ref[...].astype(compute_dtype),
                       preferred_element_type=jnp.float32)

        # MeanAct: clamp(exp(pred), 1e-5, 1e6) -- EUP exp + VPU clamp, kept in f32.
        act = jnp.clip(jnp.exp(pred), 1e-5, 1e6)

        # global_add_pool for this node tile: one-hot(graph_id) @ act, accumulated into
        # the resident (1, g_pad, tile_f) output block across node tiles.
        # The one-hot / act stay f32: M = g_pad is tiny, so the f32 pooling matmul is
        # nearly free and avoids quantizing values up to the 1e6 clamp to bf16.
        # (One-hot is rebuilt per step on purpose: it is VPU/XLU filler that co-issues
        # under the MXU/EUP; hoisting only pays when f_out tiles > 1 AND g_pad is large.)
        ids = batch_ref[...]                                    # (1, TN) int32
        g = out_ref.shape[1]
        graph_iota = lax.broadcasted_iota(jnp.int32, (g, ids.shape[1]), 0)
        onehot = (graph_iota == ids).astype(jnp.float32)        # (G_pad, TN)
        pooled = jnp.dot(onehot, act, preferred_element_type=jnp.float32)

        # Write on the first node tile, accumulate afterwards (no scratch, no epilogue).
        @pl.when(i == 0)
        def _():
            out_ref[0] = pooled

        @pl.when(i != 0)
        def _():
            out_ref[0] += pooled

    return kernel


def _round_up(v, m):
    return (v + m - 1) // m * m


def _chip_defaults():
    """Per-generation defaults: tile_f 128 on v5e (4x128^2 MXU), 256 on v6e/v7x
    (2x256^2 MXU); node-split across the 2 TensorCores only helps on v7x."""
    try:
        kind = jax.devices()[0].device_kind.lower()
    except Exception:
        kind = ""
    if "v5" in kind:
        return 128, 1
    if "v7" in kind:
        return 256, 2
    return 256, 1


def lin_meanact_pool(x, wt, batch, num_graphs, *, tile_n=1024, tile_f=None,
                     n_split=None, compute_dtype=jnp.float32):
    """Fused Linear(no bias) -> MeanAct -> global_add_pool.

    x:     (N, F_in)    f32 node embeddings
    wt:    (F_in, F_out) f32 (= W.T of the torch Linear)
    batch: (N,)         int graph id per node (torch_geometric `data.batch`)
    Returns (num_graphs, F_out) f32 pooled MeanAct(Linear(x)) sums.

    compute_dtype=bfloat16 is an explicit opt-in fast path (MXU operands of the first
    matmul only; exp/clip and the pooling matmul always stay f32).
    """
    n, f_in = x.shape
    f_out = wt.shape[1]

    def_tile_f, def_split = _chip_defaults()
    if tile_f is None:
        tile_f = def_tile_f

    # --- output-feature axis: lane-dense 128-multiple; collapse to a single F_out tile
    #     when the padded slab is small so x is streamed from HBM exactly once (and small
    #     problems run a single grid step). ---
    f_out_pad = _round_up(f_out, 128)
    if f_out_pad <= max(tile_f, 512):
        tile_f = f_out_pad
    else:
        assert tile_f % 128 == 0
        f_out_pad = _round_up(f_out_pad, tile_f)
    f_tiles = f_out_pad // tile_f

    # --- node-split across TensorCores (v7x): only when the F_out axis does not
    #     parallelize and there is enough node work per core. ---
    if n_split is None:
        n_split = def_split if (f_tiles == 1 and n >= 2 * tile_n) else 1

    # --- node-axis tiling: one full-extent tile for small inputs, else 128-multiples ---
    if n_split == 1 and n <= tile_n:
        n_pad = _round_up(max(n, 8), 8)
        tile_n = n_pad
        tiles_per_split = 1
    else:
        assert tile_n % 128 == 0, "multi-tile node axis requires tile_n % 128 == 0"
        n_pad = _round_up(n, tile_n * n_split)
        tiles_per_split = n_pad // (tile_n * n_split)

    # --- graph axis: >=8 sublanes, plus a dump row that padded nodes pool into ---
    needs_dump = n_pad > n
    g_pad = _round_up(num_graphs + (1 if needs_dump else 0), 8)
    dump_id = num_graphs

    # --- pad only what is needed; NO wrapper-side cast / full re-materialization of x ---
    x_p = x if n_pad == n else jnp.pad(x, ((0, n_pad - n), (0, 0)))
    wt_p = wt if f_out_pad == f_out else jnp.pad(wt, ((0, 0), (0, f_out_pad - f_out)))
    batch_p = jnp.full((1, n_pad), dump_id, jnp.int32).at[0, :n].set(
        batch.astype(jnp.int32))

    grid = (n_split, f_tiles, tiles_per_split)

    out_padded = pl.pallas_call(
        make_fused_kernel(compute_dtype),
        out_shape=jax.ShapeDtypeStruct((n_split, g_pad, f_out_pad), jnp.float32),
        grid_spec=pltpu.PrefetchScalarGridSpec(
            num_scalar_prefetch=0,
            grid=grid,
            in_specs=[
                pl.BlockSpec((1, tile_n),                       # graph ids
                             lambda s, j, i: (0, s * tiles_per_split + i)),
                pl.BlockSpec((tile_n, f_in),                    # node features (f32)
                             lambda s, j, i: (s * tiles_per_split + i, 0)),
                pl.BlockSpec((f_in, tile_f),                    # W.T column slab
                             lambda s, j, i: (0, j)),
            ],
            out_specs=pl.BlockSpec((1, g_pad, tile_f), lambda s, j, i: (s, 0, j)),
        ),
        compiler_params=pltpu.CompilerParams(
            dimension_semantics=("parallel", "parallel", "arbitrary"),
            vmem_limit_bytes=32 * 1024 * 1024,
        ),
    )(batch_p, x_p, wt_p)

    pooled = out_padded[0] if n_split == 1 else jnp.sum(out_padded, axis=0)
    return pooled[:num_graphs, :f_out]


def xavier_uniform(key, out_dim, in_dim):
    limit = jnp.sqrt(6.0 / (in_dim + out_dim))
    return jax.random.uniform(key, (out_dim, in_dim), jnp.float32, -limit, limit)


if __name__ == "__main__":
    # Small shapes consistent with the module tail (num_embed_features=128 in,
    # num_out_features out). Node count deliberately not a multiple of 8/128 and
    # F_OUT not a multiple of 128 so padding and the dump row are exercised.
    NUM_NODES = 203
    F_IN = 128
    F_OUT = 160
    NUM_GRAPHS = 3

    key = jax.random.PRNGKey(0)
    kx, kw = jax.random.split(key)

    x = jax.random.normal(kx, (NUM_NODES, F_IN), jnp.float32)
    # Deterministic xavier-uniform Linear weight, torch layout (out, in); kernel takes W.T.
    w = xavier_uniform(kw, F_OUT, F_IN)
    wt = w.T
    # Graph assignment vector (like torch_geometric `data.batch`), sorted per convention.
    batch = jnp.concatenate([
        jnp.zeros((70,), jnp.int32),
        jnp.full((66,), 1, jnp.int32),
        jnp.full((NUM_NODES - 136,), 2, jnp.int32),
    ])

    # Pure-JAX reference (module semantics), high-precision matmul.
    pred_ref = jnp.dot(x, wt, precision=lax.Precision.HIGHEST)
    act_ref = jnp.clip(jnp.exp(pred_ref), 1e-5, 1e6)
    pooled_ref = jnp.zeros((NUM_GRAPHS, F_OUT), jnp.float32).at[batch].add(act_ref)

    def max_rel_err(a, b):
        return float(jnp.max(jnp.abs(a - b) / (jnp.abs(b) + 1e-3)))

    # 1) Default f32 path: single grid step (full-extent node tile, one F_out tile).
    out_f32 = jax.block_until_ready(lin_meanact_pool(x, wt, batch, NUM_GRAPHS))
    assert out_f32.shape == (NUM_GRAPHS, F_OUT)
    assert max_rel_err(out_f32, pooled_ref) < 1e-2, "f32 kernel mismatch vs reference"

    # 2) Multi-tile node reduction + explicit 2-way node split (v7x-style path).
    out_split = jax.block_until_ready(
        lin_meanact_pool(x, wt, batch, NUM_GRAPHS, tile_n=128, n_split=2))
    assert max_rel_err(out_split, pooled_ref) < 1e-2, "split kernel mismatch vs reference"

    # 3) bf16 MXU-operand fast path (explicit opt-in): loose check.
    out_bf16 = jax.block_until_ready(
        lin_meanact_pool(x, wt, batch, NUM_GRAPHS, compute_dtype=jnp.bfloat16))
    assert max_rel_err(out_bf16, pooled_ref) < 5e-2, "bf16 kernel mismatch vs reference"

    print("KERNEL_OK")
</pallas_src>

<mosaic_0001>
module attributes {stable_mosaic.version = 11 : i64} {
  func.func @kernel(%arg0: i32, %arg1: i32, %arg2: i32, %arg3: memref<1x208xi32, #tpu.memory_space<vmem>>, %arg4: memref<208x128xf32, #tpu.memory_space<vmem>>, %arg5: memref<128x256xf32, #tpu.memory_space<vmem>>, %arg6: memref<1x8x256xf32, #tpu.memory_space<vmem>>) attributes {dimension_semantics = [#tpu.dimension_semantics<parallel>, #tpu.dimension_semantics<parallel>, #tpu.dimension_semantics<arbitrary>], iteration_bounds = array<i64: 1, 1, 1>, scalar_prefetch = 0 : i64, scratch_operands = 0 : i64, tpu.core_type = #tpu.core_type<tc>, window_params = [{transform_indices = @transform_0, window_bounds = array<i64: 1, 208>}, {transform_indices = @transform_1, window_bounds = array<i64: 208, 128>}, {transform_indices = @transform_2, window_bounds = array<i64: 128, 256>}, {transform_indices = @transform_3, window_bounds = array<i64: 1, 8, 256>}]} {
    %c0 = arith.constant 0 : index
    %c0_0 = arith.constant 0 : index
    %0 = vector.load %arg4[%c0, %c0_0] : memref<208x128xf32, #tpu.memory_space<vmem>>, vector<208x128xf32>
    %c0_1 = arith.constant 0 : index
    %c0_2 = arith.constant 0 : index
    %1 = vector.load %arg5[%c0_1, %c0_2] : memref<128x256xf32, #tpu.memory_space<vmem>>, vector<128x256xf32>
    %cst = arith.constant dense<0.000000e+00> : vector<208x256xf32>
    %2 = tpu.matmul %0, %1, %cst {dimension_numbers = #tpu.dot_dimension_numbers<[1], [0], [0], [1], [0, 0, 1, 1], [], []>} : vector<208x128xf32>, vector<128x256xf32>, vector<208x256xf32> -> vector<208x256xf32>
    %3 = math.exp %2 : vector<208x256xf32>
    %cst_3 = arith.constant 9.99999974E-6 : f32
    %cst_4 = arith.constant 1.000000e+06 : f32
    %4 = vector.broadcast %cst_3 : f32 to vector<208x256xf32>
    %5 = arith.maximumf %4, %3 : vector<208x256xf32>
    %6 = vector.broadcast %cst_4 : f32 to vector<208x256xf32>
    %7 = arith.minimumf %6, %5 : vector<208x256xf32>
    %c0_5 = arith.constant 0 : index
    %c0_6 = arith.constant 0 : index
    %8 = vector.load %arg3[%c0_5, %c0_6] : memref<1x208xi32, #tpu.memory_space<vmem>>, vector<1x208xi32>
    %9 = tpu.iota {dimensions = array<i32: 0>} : vector<8x208xi32>
    %10 = vector.broadcast %8 : vector<1x208xi32> to vector<8x208xi32>
    %11 = arith.cmpi eq, %9, %10 : vector<8x208xi32>
    %12 = arith.extui %11 : vector<8x208xi1> to vector<8x208xi32>
    %13 = arith.sitofp %12 : vector<8x208xi32> to vector<8x208xf32>
    %cst_7 = arith.constant dense<0.000000e+00> : vector<8x256xf32>
    %14 = tpu.matmul %13, %7, %cst_7 {dimension_numbers = #tpu.dot_dimension_numbers<[1], [0], [0], [1], [0, 0, 1, 1], [], []>} : vector<8x208xf32>, vector<208x256xf32>, vector<8x256xf32> -> vector<8x256xf32>
    %c0_i32 = arith.constant 0 : i32
    %15 = arith.cmpi eq, %arg2, %c0_i32 : i32
    %16 = arith.extui %15 : i1 to i32
    %c0_i32_8 = arith.constant 0 : i32
    %17 = arith.cmpi ne, %16, %c0_i32_8 : i32
    scf.if %17 {
      %c0_11 = arith.constant 0 : index
      %c0_12 = arith.constant 0 : index
      %c0_13 = arith.constant 0 : index
      %21 = vector.load %arg6[%c0_11, %c0_12, %c0_13] : memref<1x8x256xf32, #tpu.memory_space<vmem>>, vector<1x8x256xf32>
      %22 = vector.shape_cast %21 : vector<1x8x256xf32> to vector<8x256xf32>
      %23 = vector.shape_cast %14 : vector<8x256xf32> to vector<1x8x256xf32>
      tpu.vector_store %arg6[%c0_11, %c0_12, %c0_13], %23 {strides = array<i32>} : memref<1x8x256xf32, #tpu.memory_space<vmem>>, vector<1x8x256xf32>,
    } else {
    }
    %c0_i32_9 = arith.constant 0 : i32
    %18 = arith.cmpi ne, %arg2, %c0_i32_9 : i32
    %19 = arith.extui %18 : i1 to i32
    %c0_i32_10 = arith.constant 0 : i32
    %20 = arith.cmpi ne, %19, %c0_i32_10 : i32
    scf.if %20 {
      %c0_11 = arith.constant 0 : index
      %c0_12 = arith.constant 0 : index
      %c0_13 = arith.constant 0 : index
      %21 = vector.load %arg6[%c0_11, %c0_12, %c0_13] : memref<1x8x256xf32, #tpu.memory_space<vmem>>, vector<1x8x256xf32>
      %22 = vector.shape_cast %21 : vector<1x8x256xf32> to vector<8x256xf32>
      %23 = arith.addf %22, %14 : vector<8x256xf32>
      %c0_14 = arith.constant 0 : index
      %c0_15 = arith.constant 0 : index
      %c0_16 = arith.constant 0 : index
      %24 = vector.load %arg6[%c0_14, %c0_15, %c0_16] : memref<1x8x256xf32, #tpu.memory_space<vmem>>, vector<1x8x256xf32>
      %25 = vector.shape_cast %24 : vector<1x8x256xf32> to vector<8x256xf32>
      %26 = vector.shape_cast %23 : vector<8x256xf32> to vector<1x8x256xf32>
      tpu.vector_store %arg6[%c0_14, %c0_15, %c0_16], %26 {strides = array<i32>} : memref<1x8x256xf32, #tpu.memory_space<vmem>>, vector<1x8x256xf32>,
    } else {
    }
    return
  }
  func.func @transform_0(%arg0: i32, %arg1: i32, %arg2: i32) -> (i32, i32) {
    %c1_i32 = arith.constant 1 : i32
    %0 = arith.muli %arg0, %c1_i32 : i32
    %1 = arith.addi %0, %arg2 : i32
    %c0_i32 = arith.constant 0 : i32
    %c0_i32_0 = arith.constant 0 : i32
    return %c0_i32, %1 : i32, i32
  }
  func.func @transform_1(%arg0: i32, %arg1: i32, %arg2: i32) -> (i32, i32) {
    %c1_i32 = arith.constant 1 : i32
    %0 = arith.muli %arg0, %c1_i32 : i32
    %1 = arith.addi %0, %arg2 : i32
    %c0_i32 = arith.constant 0 : i32
    %c0_i32_0 = arith.constant 0 : i32
    return %1, %c0_i32 : i32, i32
  }
  func.func @transform_2(%arg0: i32, %arg1: i32, %arg2: i32) -> (i32, i32) {
    %c0_i32 = arith.constant 0 : i32
    %c0_i32_0 = arith.constant 0 : i32
    return %c0_i32, %arg1 : i32, i32
  }
  func.func @transform_3(%arg0: i32, %arg1: i32, %arg2: i32) -> (i32, i32, i32) {
    %c0_i32 = arith.constant 0 : i32
    %c0_i32_0 = arith.constant 0 : i32
    return %arg0, %c0_i32, %arg1 : i32, i32, i32
  }
}

</mosaic_0001>

<llo_original>
// kernel: tpu_custom_call.1
$region0: #{tpu_custom_call.1}
  #allocation0 [shape = 'u32[]', space=smem, size = 0x4, offset = 0x4, fixed_abs, tag = 'smem constant byte address 0x4 - core index']
  #allocation1 [shape = 'u32[144,128]{1,0:T(1,128)}', space=vmem, size = 0x12000, scoped, tag = 'internal scratch']
  %s0 = inlined_call_operand.hbm [shape: s32[1,208], index: 0, kind: input, shape index: {}]
  %s1 = inlined_call_operand.hbm [shape: f32[208,128], index: 1, kind: input, shape index: {}]
  %s2 = inlined_call_operand.hbm [shape: f32[128,256], index: 2, kind: input, shape index: {}]
  %s3 = inlined_call_operand.hbm [shape: f32[1,8,256], index: 3, kind: output, shape index: {}]
  %s4 = sld [smem:[#allocation0]]
  $region42: #{tpu_custom_call.1} parent=0
    _
  %s6 = ssub.s32 1, %s4
  %s7 = scalar_select 0, %s6, %s4
  $region1: #{tpu_custom_call.1} parent=0
    #allocation2 [shape = 'u8[1024]{0}', space=vmem, size = 0x400, scoped, tag = 'input window, operand 0, single buffered']
    #allocation3 [shape = 's32[1]{0}', space=sflag, size = 0x4, scoped, tag = 'scoped memory for tpu_custom_call.1']
    #allocation4 [shape = 's32[1]{0}', space=sflag, size = 0x4, scoped, tag = 'scoped memory for tpu_custom_call.1']
    #allocation5 [shape = 'u8[106496]{0}', space=vmem, size = 0x1a000, scoped, tag = 'input window, operand 1, single buffered']
    #allocation6 [shape = 's32[1]{0}', space=sflag, size = 0x4, scoped, tag = 'scoped memory for tpu_custom_call.1']
    #allocation7 [shape = 'u8[131072]{0}', space=vmem, size = 0x20000, scoped, tag = 'input window, operand 2, single buffered']
    #allocation8 [shape = 'u8[8192]{0}', space=vmem, size = 0x2000, scoped, tag = 'output window, operand 0, single buffered']
    %8 = vsyncpa [#allocation3], 0
    %9 = vsyncpa [#allocation6], 0
    %10 = vsyncpa [#allocation4], 0
    // Predicated region
    $region2: #{tpu_custom_call.1} parent=1 // pred_check
      _
    $region3: #{tpu_custom_call.1} parent=1 // pred_check_branch
      %12 = sbr.rel (0) target = $region5
    $region4: #{tpu_custom_call.1} parent=1 // pred_region
      %s13 = sadd.s32 0, 0
      %s14 = smul.u32 2, %s13
      %s16 = ssub.s32 32, 32
      %17 = vsyncadd [#allocation3], %s16
      %s18 = smul.addr %s14, 16
      %s19 = scalar_lea.hbm %s0, %s18
      %s21 = sshll.u32 [#allocation2], 4
      %s22 = int_to_ptr.vmem [resolvable:$true] %s21
      %24 = dma.hbm_to_vmem [thread:$0]  %s19, 32, %s22, [#allocation3]
    $region5: #{tpu_custom_call.1} parent=1 // pred_fallthru
      _
    // Predicated region
    $region6: #{tpu_custom_call.1} parent=1 // pred_check
      _
    $region7: #{tpu_custom_call.1} parent=1 // pred_check_branch
      %26 = sbr.rel (0) target = $region9
    $region8: #{tpu_custom_call.1} parent=1 // pred_region
      %s27 = sadd.s32 0, 0
      %s28 = smul.u32 26, %s27
      %s30 = ssub.s32 3328, 3328
      %31 = vsyncadd [#allocation6], %s30
      %s32 = smul.addr %s28, 128
      %s33 = scalar_lea.hbm %s1, %s32
      %s34 = sshll.u32 [#allocation5], 4
      %s35 = int_to_ptr.vmem [resolvable:$true] %s34
      %40 = dma.hbm_to_vmem [thread:$0]  %s33, 3328, %s35, [#allocation6], 128, 128, 8
    $region9: #{tpu_custom_call.1} parent=1 // pred_fallthru
      _
    // Predicated region
    $region10: #{tpu_custom_call.1} parent=1 // pred_check
      _
    $region11: #{tpu_custom_call.1} parent=1 // pred_check_branch
      %42 = sbr.rel (0) target = $region13
    $region12: #{tpu_custom_call.1} parent=1 // pred_region
      %s44 = ssub.s32 4096, 4096
      %45 = vsyncadd [#allocation6], %s44
      %s46 = sshll.u32 [#allocation7], 4
      %s47 = int_to_ptr.vmem [resolvable:$true] %s46
      %52 = dma.hbm_to_vmem [thread:$0]  %s2, 4096, %s47, [#allocation6], 256, 256, 16
    $region13: #{tpu_custom_call.1} parent=1 // pred_fallthru
      _
    // Predicated region
    $region14: #{tpu_custom_call.1} parent=1 // pred_check
      _
    $region15: #{tpu_custom_call.1} parent=1 // pred_check_branch
      %54 = sbr.rel (0) target = $region17
    $region16: #{tpu_custom_call.1} parent=1 // pred_region
      %55 = dma.done [#allocation3], 32
    $region17: #{tpu_custom_call.1} parent=1 // pred_fallthru
      _
    // Predicated region
    $region18: #{tpu_custom_call.1} parent=1 // pred_check
      _
    $region19: #{tpu_custom_call.1} parent=1 // pred_check_branch
      %57 = sbr.rel (0) target = $region21
    $region20: #{tpu_custom_call.1} parent=1 // pred_region
      %58 = dma.done [#allocation6], 3328
    $region21: #{tpu_custom_call.1} parent=1 // pred_fallthru
      _
    // Predicated region
    $region22: #{tpu_custom_call.1} parent=1 // pred_check
      _
    $region23: #{tpu_custom_call.1} parent=1 // pred_check_branch
      %60 = sbr.rel (0) target = $region25
    $region24: #{tpu_custom_call.1} parent=1 // pred_region
      %61 = dma.done [#allocation6], 4096
    $region25: #{tpu_custom_call.1} parent=1 // pred_fallthru
      _
    %s62 = sadd.s32 0, 0
    %s63 = smul.u32 2, %s62
    %s64 = sadd.s32 0, 0
    %s65 = smul.u32 26, %s64
    %v66 = vld [vmem:[#allocation5] sm:$0xff]
    %v67 = vld [vmem:[#allocation5 + $0x8] sm:$0xff]
    %v68 = vld [vmem:[#allocation5 + $0x10] sm:$0xff]
    %v69 = vld [vmem:[#allocation5 + $0x18] sm:$0xff]
    %v70 = vld [vmem:[#allocation5 + $0x20] sm:$0xff]
    %v71 = vld [vmem:[#allocation5 + $0x28] sm:$0xff]
    %v72 = vld [vmem:[#allocation5 + $0x30] sm:$0xff]
    %v73 = vld [vmem:[#allocation5 + $0x38] sm:$0xff]
    %v74 = vld [vmem:[#allocation5 + $0x40] sm:$0xff]
    %v75 = vld [vmem:[#allocation5 + $0x48] sm:$0xff]
    %v76 = vld [vmem:[#allocation5 + $0x50] sm:$0xff]
    %v77 = vld [vmem:[#allocation5 + $0x58] sm:$0xff]
    %v78 = vld [vmem:[#allocation5 + $0x60] sm:$0xff]
    %v79 = vld [vmem:[#allocation5 + $0x68] sm:$0xff]
    %v80 = vld [vmem:[#allocation5 + $0x70] sm:$0xff]
    %v81 = vld [vmem:[#allocation5 + $0x78] sm:$0xff]
    %v82 = vld [vmem:[#allocation5 + $0x80] sm:$0xff]
    %v83 = vld [vmem:[#allocation5 + $0x88] sm:$0xff]
    %v84 = vld [vmem:[#allocation5 + $0x90] sm:$0xff]
    %v85 = vld [vmem:[#allocation5 + $0x98] sm:$0xff]
    %v86 = vld [vmem:[#allocation5 + $0xa0] sm:$0xff]
    %v87 = vld [vmem:[#allocation5 + $0xa8] sm:$0xff]
    %v88 = vld [vmem:[#allocation5 + $0xb0] sm:$0xff]
    %v89 = vld [vmem:[#allocation5 + $0xb8] sm:$0xff]
    %v90 = vld [vmem:[#allocation5 + $0xc0] sm:$0xff]
    %v91 = vld [vmem:[#allocation5 + $0xc8] sm:$0xff]
    %v92 = vld [vmem:[#allocation7] sm:$0xff]
    %v93 = vld [vmem:[#allocation7 + $0x8] sm:$0xff]
    %v94 = vld [vmem:[#allocation7 + $0x10] sm:$0xff]
    %v95 = vld [vmem:[#allocation7 + $0x18] sm:$0xff]
    %v96 = vld [vmem:[#allocation7 + $0x20] sm:$0xff]
    %v97 = vld [vmem:[#allocation7 + $0x28] sm:$0xff]
    %v98 = vld [vmem:[#allocation7 + $0x30] sm:$0xff]
    %v99 = vld [vmem:[#allocation7 + $0x38] sm:$0xff]
    %v100 = vld [vmem:[#allocation7 + $0x40] sm:$0xff]
    %v101 = vld [vmem:[#allocation7 + $0x48] sm:$0xff]
    %v102 = vld [vmem:[#allocation7 + $0x50] sm:$0xff]
    %v103 = vld [vmem:[#allocation7 + $0x58] sm:$0xff]
    %v104 = vld [vmem:[#allocation7 + $0x60] sm:$0xff]
    %v105 = vld [vmem:[#allocation7 + $0x68] sm:$0xff]
    %v106 = vld [vmem:[#allocation7 + $0x70] sm:$0xff]
    %v107 = vld [vmem:[#allocation7 + $0x78] sm:$0xff]
    %v108 = vld [vmem:[#allocation7 + $0x80] sm:$0xff]
    %v109 = vld [vmem:[#allocation7 + $0x88] sm:$0xff]
    %v110 = vld [vmem:[#allocation7 + $0x90] sm:$0xff]
    %v111 = vld [vmem:[#allocation7 + $0x98] sm:$0xff]
    %v112 = vld [vmem:[#allocation7 + $0xa0] sm:$0xff]
    %v113 = vld [vmem:[#allocation7 + $0xa8] sm:$0xff]
    %v114 = vld [vmem:[#allocation7 + $0xb0] sm:$0xff]
    %v115 = vld [vmem:[#allocation7 + $0xb8] sm:$0xff]
    %v116 = vld [vmem:[#allocation7 + $0xc0] sm:$0xff]
    %v117 = vld [vmem:[#allocation7 + $0xc8] sm:$0xff]
    %v118 = vld [vmem:[#allocation7 + $0xd0] sm:$0xff]
    %v119 = vld [vmem:[#allocation7 + $0xd8] sm:$0xff]
    %v120 = vld [vmem:[#allocation7 + $0xe0] sm:$0xff]
    %v121 = vld [vmem:[#allocation7 + $0xe8] sm:$0xff]
    %v122 = vld [vmem:[#allocation7 + $0xf0] sm:$0xff]
    %v123 = vld [vmem:[#allocation7 + $0xf8] sm:$0xff]
    %124 = vmatprep.subr.mxu0 %v123
    %125 = vmatpush1.msra.mxu0 %v122
    %126 = vmatprep.subr.mxu0 %v121
    %127 = vmatpush1.msra.mxu0 %v120
    %128 = vmatprep.subr.mxu0 %v119
    %129 = vmatpush1.msra.mxu0 %v118
    %130 = vmatprep.subr.mxu0 %v117
    %131 = vmatpush1.msra.mxu0 %v116
    %132 = vmatprep.subr.mxu0 %v115
    %133 = vmatpush1.msra.mxu0 %v114
    %134 = vmatprep.subr.mxu0 %v113
    %135 = vmatpush1.msra.mxu0 %v112
    %136 = vmatprep.subr.mxu0 %v111
    %137 = vmatpush1.msra.mxu0 %v110
    %138 = vmatprep.subr.mxu0 %v109
    %139 = vmatpush1.msra.mxu0 %v108
    %140 = vmatprep.subr.mxu0 %v107
    %141 = vmatpush1.msra.mxu0 %v106
    %142 = vmatprep.subr.mxu0 %v105
    %143 = vmatpush1.msra.mxu0 %v104
    %144 = vmatprep.subr.mxu0 %v103
    %145 = vmatpush1.msra.mxu0 %v102
    %146 = vmatprep.subr.mxu0 %v101
    %147 = vmatpush1.msra.mxu0 %v100
    %148 = vmatprep.subr.mxu0 %v99
    %149 = vmatpush1.msra.mxu0 %v98
    %150 = vmatprep.subr.mxu0 %v97
    %151 = vmatpush1.msra.mxu0 %v96
    %152 = vmatprep.subr.mxu0 %v95
    %153 = vmatpush1.msra.mxu0 %v94
    %154 = vmatprep.subr.mxu0 %v93
    %155 = vmatpush1.msra.mxu0 %v92
    %156 = vmatprep.subr.mxu0 0.0
    %157 = vmatpush2.msra.mxu0 0.0
    %158 = vmatprep.subr.mxu0 0.0
    %159 = vmatpush2.msra.mxu0 0.0
    %160 = vmatprep.subr.mxu0 0.0
    %161 = vmatpush2.msra.mxu0 0.0
    %162 = vmatprep.subr.mxu0 0.0
    %163 = vmatpush2.msra.mxu0 0.0
    %164 = vmatprep.subr.mxu0 0.0
    %165 = vmatpush2.msra.mxu0 0.0
    %166 = vmatprep.subr.mxu0 0.0
    %167 = vmatpush2.msra.mxu0 0.0
    %168 = vmatprep.subr.mxu0 0.0
    %169 = vmatpush2.msra.mxu0 0.0
    %170 = vmatprep.subr.mxu0 0.0
    %171 = vmatpush2.msra.mxu0 0.0
    %172 = vmatprep.subr.mxu0 0.0
    %173 = vmatpush2.msra.mxu0 0.0
    %174 = vmatprep.subr.mxu0 0.0
    %175 = vmatpush2.msra.mxu0 0.0
    %176 = vmatprep.subr.mxu0 0.0
    %177 = vmatpush2.msra.mxu0 0.0
    %178 = vmatprep.subr.mxu0 0.0
    %179 = vmatpush2.msra.mxu0 0.0
    %180 = vmatprep.subr.mxu0 0.0
    %181 = vmatpush2.msra.mxu0 0.0
    %182 = vmatprep.subr.mxu0 0.0
    %183 = vmatpush2.msra.mxu0 0.0
    %184 = vmatprep.subr.mxu0 0.0
    %185 = vmatpush2.msra.mxu0 0.0
    %186 = vmatprep.subr.mxu0 0.0
    %187 = vmatpush2.msra.mxu0 0.0
    %188 = vmatprep.mubr.f32.mxu0 0.0
    %189 = vmatmul.mubr.f32.gmra.mxu0 %v66
    %v190 = vpop.f32.mrf.mxu0
    %v191 = vadd.f32 0.0, %v190
    %v192 = vpop.f32.mrf.mxu0
    %v193 = vadd.f32 0.0, %v192
    %194 = vmatprep.mubr.f32.mxu0 0.0
    %195 = vmatmul.mubr.f32.gmra.mxu0 %v67
    %v196 = vpop.f32.mrf.mxu0
    %v197 = vadd.f32 0.0, %v196
    %v198 = vpop.f32.mrf.mxu0
    %v199 = vadd.f32 0.0, %v198
    %200 = vmatprep.mubr.f32.mxu0 0.0
    %201 = vmatmul.mubr.f32.gmra.mxu0 %v68
    %v202 = vpop.f32.mrf.mxu0
    %v203 = vadd.f32 0.0, %v202
    %v204 = vpop.f32.mrf.mxu0
    %v205 = vadd.f32 0.0, %v204
    %206 = vmatprep.mubr.f32.mxu0 0.0
    %207 = vmatmul.mubr.f32.gmra.mxu0 %v69
    %v208 = vpop.f32.mrf.mxu0
    %v209 = vadd.f32 0.0, %v208
    %v210 = vpop.f32.mrf.mxu0
    %v211 = vadd.f32 0.0, %v210
    %212 = vmatprep.mubr.f32.mxu0 0.0
    %213 = vmatmul.mubr.f32.gmra.mxu0 %v70
    %v214 = vpop.f32.mrf.mxu0
    %v215 = vadd.f32 0.0, %v214
    %v216 = vpop.f32.mrf.mxu0
    %v217 = vadd.f32 0.0, %v216
    %218 = vmatprep.mubr.f32.mxu0 0.0
    %219 = vmatmul.mubr.f32.gmra.mxu0 %v71
    %v220 = vpop.f32.mrf.mxu0
    %v221 = vadd.f32 0.0, %v220
    %v222 = vpop.f32.mrf.mxu0
    %v223 = vadd.f32 0.0, %v222
    %224 = vmatprep.mubr.f32.mxu0 0.0
    %225 = vmatmul.mubr.f32.gmra.mxu0 %v72
    %v226 = vpop.f32.mrf.mxu0
    %v227 = vadd.f32 0.0, %v226
    %v228 = vpop.f32.mrf.mxu0
    %v229 = vadd.f32 0.0, %v228
    %230 = vmatprep.mubr.f32.mxu0 0.0
    %231 = vmatmul.mubr.f32.gmra.mxu0 %v73
    %v232 = vpop.f32.mrf.mxu0
    %v233 = vadd.f32 0.0, %v232
    %v234 = vpop.f32.mrf.mxu0
    %v235 = vadd.f32 0.0, %v234
    %236 = vmatprep.mubr.f32.mxu0 0.0
    %237 = vmatmul.mubr.f32.gmra.mxu0 %v74
    %v238 = vpop.f32.mrf.mxu0
    %v239 = vadd.f32 0.0, %v238
    %v240 = vpop.f32.mrf.mxu0
    %v241 = vadd.f32 0.0, %v240
    %242 = vmatprep.mubr.f32.mxu0 0.0
    %243 = vmatmul.mubr.f32.gmra.mxu0 %v75
    %v244 = vpop.f32.mrf.mxu0
    %v245 = vadd.f32 0.0, %v244
    %v246 = vpop.f32.mrf.mxu0
    %v247 = vadd.f32 0.0, %v246
    %248 = vmatprep.mubr.f32.mxu0 0.0
    %249 = vmatmul.mubr.f32.gmra.mxu0 %v76
    %v250 = vpop.f32.mrf.mxu0
    %v251 = vadd.f32 0.0, %v250
    %v252 = vpop.f32.mrf.mxu0
    %v253 = vadd.f32 0.0, %v252
    %254 = vmatprep.mubr.f32.mxu0 0.0
    %255 = vmatmul.mubr.f32.gmra.mxu0 %v77
    %v256 = vpop.f32.mrf.mxu0
    %v257 = vadd.f32 0.0, %v256
    %v258 = vpop.f32.mrf.mxu0
    %v259 = vadd.f32 0.0, %v258
    %260 = vmatprep.mubr.f32.mxu0 0.0
    %261 = vmatmul.mubr.f32.gmra.mxu0 %v78
    %v262 = vpop.f32.mrf.mxu0
    %v263 = vadd.f32 0.0, %v262
    %v264 = vpop.f32.mrf.mxu0
    %v265 = vadd.f32 0.0, %v264
    %266 = vmatprep.mubr.f32.mxu0 0.0
    %267 = vmatmul.mubr.f32.gmra.mxu0 %v79
    %v268 = vpop.f32.mrf.mxu0
    %v269 = vadd.f32 0.0, %v268
    %v270 = vpop.f32.mrf.mxu0
    %v271 = vadd.f32 0.0, %v270
    %272 = vmatprep.mubr.f32.mxu0 0.0
    %273 = vmatmul.mubr.f32.gmra.mxu0 %v80
    %v274 = vpop.f32.mrf.mxu0
    %v275 = vadd.f32 0.0, %v274
    %v276 = vpop.f32.mrf.mxu0
    %v277 = vadd.f32 0.0, %v276
    %278 = vmatprep.mubr.f32.mxu0 0.0
    %279 = vmatmul.mubr.f32.gmra.mxu0 %v81
    %v280 = vpop.f32.mrf.mxu0
    %v281 = vadd.f32 0.0, %v280
    %v282 = vpop.f32.mrf.mxu0
    %v283 = vadd.f32 0.0, %v282
    %284 = vmatprep.mubr.f32.mxu0 0.0
    %285 = vmatmul.mubr.f32.gmra.mxu0 %v82
    %v286 = vpop.f32.mrf.mxu0
    %v287 = vadd.f32 0.0, %v286
    %v288 = vpop.f32.mrf.mxu0
    %v289 = vadd.f32 0.0, %v288
    %290 = vmatprep.mubr.f32.mxu0 0.0
    %291 = vmatmul.mubr.f32.gmra.mxu0 %v83
    %v292 = vpop.f32.mrf.mxu0
    %v293 = vadd.f32 0.0, %v292
    %v294 = vpop.f32.mrf.mxu0
    %v295 = vadd.f32 0.0, %v294
    %296 = vmatprep.mubr.f32.mxu0 0.0
    %297 = vmatmul.mubr.f32.gmra.mxu0 %v84
    %v298 = vpop.f32.mrf.mxu0
    %v299 = vadd.f32 0.0, %v298
    %v300 = vpop.f32.mrf.mxu0
    %v301 = vadd.f32 0.0, %v300
    %302 = vmatprep.mubr.f32.mxu0 0.0
    %303 = vmatmul.mubr.f32.gmra.mxu0 %v85
    %v304 = vpop.f32.mrf.mxu0
    %v305 = vadd.f32 0.0, %v304
    %v306 = vpop.f32.mrf.mxu0
    %v307 = vadd.f32 0.0, %v306
    %308 = vmatprep.mubr.f32.mxu0 0.0
    %309 = vmatmul.mubr.f32.gmra.mxu0 %v86
    %v310 = vpop.f32.mrf.mxu0
    %v311 = vadd.f32 0.0, %v310
    %v312 = vpop.f32.mrf.mxu0
    %v313 = vadd.f32 0.0, %v312
    %314 = vmatprep.mubr.f32.mxu0 0.0
    %315 = vmatmul.mubr.f32.gmra.mxu0 %v87
    %v316 = vpop.f32.mrf.mxu0
    %v317 = vadd.f32 0.0, %v316
    %v318 = vpop.f32.mrf.mxu0
    %v319 = vadd.f32 0.0, %v318
    %320 = vmatprep.mubr.f32.mxu0 0.0
    %321 = vmatmul.mubr.f32.gmra.mxu0 %v88
    %v322 = vpop.f32.mrf.mxu0
    %v323 = vadd.f32 0.0, %v322
    %v324 = vpop.f32.mrf.mxu0
    %v325 = vadd.f32 0.0, %v324
    %326 = vmatprep.mubr.f32.mxu0 0.0
    %327 = vmatmul.mubr.f32.gmra.mxu0 %v89
    %v328 = vpop.f32.mrf.mxu0
    %v329 = vadd.f32 0.0, %v328
    %v330 = vpop.f32.mrf.mxu0
    %v331 = vadd.f32 0.0, %v330
    %332 = vmatprep.mubr.f32.mxu0 0.0
    %333 = vmatmul.mubr.f32.gmra.mxu0 %v90
    %v334 = vpop.f32.mrf.mxu0
    %v335 = vadd.f32 0.0, %v334
    %v336 = vpop.f32.mrf.mxu0
    %v337 = vadd.f32 0.0, %v336
    %338 = vmatprep.mubr.f32.mxu0 0.0
    %339 = vmatmul.mubr.f32.gmra.mxu0 %v91
    %v340 = vpop.f32.mrf.mxu0
    %v341 = vadd.f32 0.0, %v340
    %v342 = vpop.f32.mrf.mxu0
    %v343 = vadd.f32 0.0, %v342
    %344 = vdwg.mxu0
    %v345 = vmul.f32 %v191, 1.442695
    %v346 = vpow.pop %v345
    %v347 = vmul.f32 %v193, 1.442695
    %v348 = vpow.pop %v347
    %v349 = vmul.f32 %v197, 1.442695
    %v350 = vpow.pop %v349
    %v351 = vmul.f32 %v199, 1.442695
    %v352 = vpow.pop %v351
    %v353 = vmul.f32 %v203, 1.442695
    %v354 = vpow.pop %v353
    %v355 = vmul.f32 %v205, 1.442695
    %v356 = vpow.pop %v355
    %v357 = vmul.f32 %v209, 1.442695
    %v358 = vpow.pop %v357
    %v359 = vmul.f32 %v211, 1.442695
    %v360 = vpow.pop %v359
    %v361 = vmul.f32 %v215, 1.442695
    %v362 = vpow.pop %v361
    %v363 = vmul.f32 %v217, 1.442695
    %v364 = vpow.pop %v363
    %v365 = vmul.f32 %v221, 1.442695
    %v366 = vpow.pop %v365
    %v367 = vmul.f32 %v223, 1.442695
    %v368 = vpow.pop %v367
    %v369 = vmul.f32 %v227, 1.442695
    %v370 = vpow.pop %v369
    %v371 = vmul.f32 %v229, 1.442695
    %v372 = vpow.pop %v371
    %v373 = vmul.f32 %v233, 1.442695
    %v374 = vpow.pop %v373
    %v375 = vmul.f32 %v235, 1.442695
    %v376 = vpow.pop %v375
    %v377 = vmul.f32 %v239, 1.442695
    %v378 = vpow.pop %v377
    %v379 = vmul.f32 %v241, 1.442695
    %v380 = vpow.pop %v379
    %v381 = vmul.f32 %v245, 1.442695
    %v382 = vpow.pop %v381
    %v383 = vmul.f32 %v247, 1.442695
    %v384 = vpow.pop %v383
    %v385 = vmul.f32 %v251, 1.442695
    %v386 = vpow.pop %v385
    %v387 = vmul.f32 %v253, 1.442695
    %v388 = vpow.pop %v387
    %v389 = vmul.f32 %v257, 1.442695
    %v390 = vpow.pop %v389
    %v391 = vmul.f32 %v259, 1.442695
    %v392 = vpow.pop %v391
    %v393 = vmul.f32 %v263, 1.442695
    %v394 = vpow.pop %v393
    %v395 = vmul.f32 %v265, 1.442695
    %v396 = vpow.pop %v395
    %v397 = vmul.f32 %v269, 1.442695
    %v398 = vpow.pop %v397
    %v399 = vmul.f32 %v271, 1.442695
    %v400 = vpow.pop %v399
    %v401 = vmul.f32 %v275, 1.442695
    %v402 = vpow.pop %v401
    %v403 = vmul.f32 %v277, 1.442695
    %v404 = vpow.pop %v403
    %v405 = vmul.f32 %v281, 1.442695
    %v406 = vpow.pop %v405
    %v407 = vmul.f32 %v283, 1.442695
    %v408 = vpow.pop %v407
    %v409 = vmul.f32 %v287, 1.442695
    %v410 = vpow.pop %v409
    %v411 = vmul.f32 %v289, 1.442695
    %v412 = vpow.pop %v411
    %v413 = vmul.f32 %v293, 1.442695
    %v414 = vpow.pop %v413
    %v415 = vmul.f32 %v295, 1.442695
    %v416 = vpow.pop %v415
    %v417 = vmul.f32 %v299, 1.442695
    %v418 = vpow.pop %v417
    %v419 = vmul.f32 %v301, 1.442695
    %v420 = vpow.pop %v419
    %v421 = vmul.f32 %v305, 1.442695
    %v422 = vpow.pop %v421
    %v423 = vmul.f32 %v307, 1.442695
    %v424 = vpow.pop %v423
    %v425 = vmul.f32 %v311, 1.442695
    %v426 = vpow.pop %v425
    %v427 = vmul.f32 %v313, 1.442695
    %v428 = vpow.pop %v427
    %v429 = vmul.f32 %v317, 1.442695
    %v430 = vpow.pop %v429
    %v431 = vmul.f32 %v319, 1.442695
    %v432 = vpow.pop %v431
    %v433 = vmul.f32 %v323, 1.442695
    %v434 = vpow.pop %v433
    %v435 = vmul.f32 %v325, 1.442695
    %v436 = vpow.pop %v435
    %v437 = vmul.f32 %v329, 1.442695
    %v438 = vpow.pop %v437
    %v439 = vmul.f32 %v331, 1.442695
    %v440 = vpow.pop %v439
    %v441 = vmul.f32 %v335, 1.442695
    %v442 = vpow.pop %v441
    %v443 = vmul.f32 %v337, 1.442695
    %v444 = vpow.pop %v443
    %v445 = vmul.f32 %v341, 1.442695
    %v446 = vpow.pop %v445
    %v447 = vmul.f32 %v343, 1.442695
    %v448 = vpow.pop %v447
    %v449 = vmax.f32 %v346, 1e-05
    %v450 = vmax.f32 %v348, 1e-05
    %v451 = vmax.f32 %v350, 1e-05
    %v452 = vmax.f32 %v352, 1e-05
    %v453 = vmax.f32 %v354, 1e-05
    %v454 = vmax.f32 %v356, 1e-05
    %v455 = vmax.f32 %v358, 1e-05
    %v456 = vmax.f32 %v360, 1e-05
    %v457 = vmax.f32 %v362, 1e-05
    %v458 = vmax.f32 %v364, 1e-05
    %v459 = vmax.f32 %v366, 1e-05
    %v460 = vmax.f32 %v368, 1e-05
    %v461 = vmax.f32 %v370, 1e-05
    %v462 = vmax.f32 %v372, 1e-05
    %v463 = vmax.f32 %v374, 1e-05
    %v464 = vmax.f32 %v376, 1e-05
    %v465 = vmax.f32 %v378, 1e-05
    %v466 = vmax.f32 %v380, 1e-05
    %v467 = vmax.f32 %v382, 1e-05
    %v468 = vmax.f32 %v384, 1e-05
    %v469 = vmax.f32 %v386, 1e-05
    %v470 = vmax.f32 %v388, 1e-05
    %v471 = vmax.f32 %v390, 1e-05
    %v472 = vmax.f32 %v392, 1e-05
    %v473 = vmax.f32 %v394, 1e-05
    %v474 = vmax.f32 %v396, 1e-05
    %v475 = vmax.f32 %v398, 1e-05
    %v476 = vmax.f32 %v400, 1e-05
    %v477 = vmax.f32 %v402, 1e-05
    %v478 = vmax.f32 %v404, 1e-05
    %v479 = vmax.f32 %v406, 1e-05
    %v480 = vmax.f32 %v408, 1e-05
    %v481 = vmax.f32 %v410, 1e-05
    %v482 = vmax.f32 %v412, 1e-05
    %v483 = vmax.f32 %v414, 1e-05
    %v484 = vmax.f32 %v416, 1e-05
    %v485 = vmax.f32 %v418, 1e-05
    %v486 = vmax.f32 %v420, 1e-05
    %v487 = vmax.f32 %v422, 1e-05
    %v488 = vmax.f32 %v424, 1e-05
    %v489 = vmax.f32 %v426, 1e-05
    %v490 = vmax.f32 %v428, 1e-05
    %v491 = vmax.f32 %v430, 1e-05
    %v492 = vmax.f32 %v432, 1e-05
    %v493 = vmax.f32 %v434, 1e-05
    %v494 = vmax.f32 %v436, 1e-05
    %v495 = vmax.f32 %v438, 1e-05
    %v496 = vmax.f32 %v440, 1e-05
    %v497 = vmax.f32 %v442, 1e-05
    %v498 = vmax.f32 %v444, 1e-05
    %v499 = vmax.f32 %v446, 1e-05
    %v500 = vmax.f32 %v448, 1e-05
    %v501 = vmin.f32 %v449, 1000000.0
    %v502 = vmin.f32 %v450, 1000000.0
    %v503 = vmin.f32 %v451, 1000000.0
    %v504 = vmin.f32 %v452, 1000000.0
    %v505 = vmin.f32 %v453, 1000000.0
    %v506 = vmin.f32 %v454, 1000000.0
    %v507 = vmin.f32 %v455, 1000000.0
    %v508 = vmin.f32 %v456, 1000000.0
    %v509 = vmin.f32 %v457, 1000000.0
    %v510 = vmin.f32 %v458, 1000000.0
    %v511 = vmin.f32 %v459, 1000000.0
    %v512 = vmin.f32 %v460, 1000000.0
    %v513 = vmin.f32 %v461, 1000000.0
    %v514 = vmin.f32 %v462, 1000000.0
    %v515 = vmin.f32 %v463, 1000000.0
    %v516 = vmin.f32 %v464, 1000000.0
    %v517 = vmin.f32 %v465, 1000000.0
    %v518 = vmin.f32 %v466, 1000000.0
    %v519 = vmin.f32 %v467, 1000000.0
    %v520 = vmin.f32 %v468, 1000000.0
    %v521 = vmin.f32 %v469, 1000000.0
    %v522 = vmin.f32 %v470, 1000000.0
    %v523 = vmin.f32 %v471, 1000000.0
    %v524 = vmin.f32 %v472, 1000000.0
    %v525 = vmin.f32 %v473, 1000000.0
    %v526 = vmin.f32 %v474, 1000000.0
    %v527 = vmin.f32 %v475, 1000000.0
    %v528 = vmin.f32 %v476, 1000000.0
    %v529 = vmin.f32 %v477, 1000000.0
    %v530 = vmin.f32 %v478, 1000000.0
    %v531 = vmin.f32 %v479, 1000000.0
    %v532 = vmin.f32 %v480, 1000000.0
    %v533 = vmin.f32 %v481, 1000000.0
    %v534 = vmin.f32 %v482, 1000000.0
    %v535 = vmin.f32 %v483, 1000000.0
    %v536 = vmin.f32 %v484, 1000000.0
    %v537 = vmin.f32 %v485, 1000000.0
    %v538 = vmin.f32 %v486, 1000000.0
    %v539 = vmin.f32 %v487, 1000000.0
    %v540 = vmin.f32 %v488, 1000000.0
    %v541 = vmin.f32 %v489, 1000000.0
    %v542 = vmin.f32 %v490, 1000000.0
    %v543 = vmin.f32 %v491, 1000000.0
    %v544 = vmin.f32 %v492, 1000000.0
    %v545 = vmin.f32 %v493, 1000000.0
    %v546 = vmin.f32 %v494, 1000000.0
    %v547 = vmin.f32 %v495, 1000000.0
    %v548 = vmin.f32 %v496, 1000000.0
    %v549 = vmin.f32 %v497, 1000000.0
    %v550 = vmin.f32 %v498, 1000000.0
    %v551 = vmin.f32 %v499, 1000000.0
    %v552 = vmin.f32 %v500, 1000000.0
    %v553 = vld [vmem:[#allocation2] sm:$0x3]
    %v554 = vlaneseq
    %v555 = vshrl.u32 %v554, 7
    %v556 = vlaneseq
    %v557 = vshrl.u32 %v556, 7
    %v558 = vsub.s32 0, %v557
    %v559 = vrot.slane %v553, %v558
    %v560 = vlaneseq
    %v561 = vshrl.u32 %v560, 7
    %v562 = vsub.s32 1, %v561
    %v563 = vrot.slane %v553, %v562
    %vm564 = vcmp.eq.s32.totalorder %v555, %v559
    %vm565 = vcmp.eq.s32.totalorder %v555, %v563
    %v566 = vsel %vm564, 1, 0
    %v567 = vsel %vm565, 1, 0
    %v568 = vcvt.s32.f32 %v566
    %v569 = vcvt.s32.f32 %v567
    %vm570 = vcmask 654336
    %v572 = vsel %vm570, %v569, 0
    %574 = vmatprep.subr.mxu0 %v532
    %575 = vmatpush1.msra.mxu0 %v531
    %576 = vmatprep.subr.mxu0 %v530
    %577 = vmatpush1.msra.mxu0 %v529
    %578 = vmatprep.subr.mxu0 %v528
    %579 = vmatpush1.msra.mxu0 %v527
    %580 = vmatprep.subr.mxu0 %v526
    %581 = vmatpush1.msra.mxu0 %v525
    %582 = vmatprep.subr.mxu0 %v524
    %583 = vmatpush1.msra.mxu0 %v523
    %584 = vmatprep.subr.mxu0 %v522
    %585 = vmatpush1.msra.mxu0 %v521
    %586 = vmatprep.subr.mxu0 %v520
    %587 = vmatpush1.msra.mxu0 %v519
    %588 = vmatprep.subr.mxu0 %v518
    %589 = vmatpush1.msra.mxu0 %v517
    %590 = vmatprep.subr.mxu0 %v516
    %591 = vmatpush1.msra.mxu0 %v515
    %592 = vmatprep.subr.mxu0 %v514
    %593 = vmatpush1.msra.mxu0 %v513
    %594 = vmatprep.subr.mxu0 %v512
    %595 = vmatpush1.msra.mxu0 %v511
    %596 = vmatprep.subr.mxu0 %v510
    %597 = vmatpush1.msra.mxu0 %v509
    %598 = vmatprep.subr.mxu0 %v508
    %599 = vmatpush1.msra.mxu0 %v507
    %600 = vmatprep.subr.mxu0 %v506
    %601 = vmatpush1.msra.mxu0 %v505
    %602 = vmatprep.subr.mxu0 %v504
    %603 = vmatpush1.msra.mxu0 %v503
    %604 = vmatprep.subr.mxu0 %v502
    %605 = vmatpush1.msra.mxu0 %v501
    %606 = vmatprep.subr.mxu0 0.0
    %607 = vmatpush2.msra.mxu0 0.0
    %608 = vmatprep.subr.mxu0 0.0
    %609 = vmatpush2.msra.mxu0 0.0
    %610 = vmatprep.subr.mxu0 0.0
    %611 = vmatpush2.msra.mxu0 0.0
    %612 = vmatprep.subr.mxu0 0.0
    %613 = vmatpush2.msra.mxu0 0.0
    %614 = vmatprep.subr.mxu0 0.0
    %615 = vmatpush2.msra.mxu0 0.0
    %616 = vmatprep.subr.mxu0 0.0
    %617 = vmatpush2.msra.mxu0 0.0
    %618 = vmatprep.subr.mxu0 %v552
    %619 = vmatpush2.msra.mxu0 %v551
    %620 = vmatprep.subr.mxu0 %v550
    %621 = vmatpush2.msra.mxu0 %v549
    %622 = vmatprep.subr.mxu0 %v548
    %623 = vmatpush2.msra.mxu0 %v547
    %624 = vmatprep.subr.mxu0 %v546
    %625 = vmatpush2.msra.mxu0 %v545
    %626 = vmatprep.subr.mxu0 %v544
    %627 = vmatpush2.msra.mxu0 %v543
    %628 = vmatprep.subr.mxu0 %v542
    %629 = vmatpush2.msra.mxu0 %v541
    %630 = vmatprep.subr.mxu0 %v540
    %631 = vmatpush2.msra.mxu0 %v539
    %632 = vmatprep.subr.mxu0 %v538
    %633 = vmatpush2.msra.mxu0 %v537
    %634 = vmatprep.subr.mxu0 %v536
    %635 = vmatpush2.msra.mxu0 %v535
    %636 = vmatprep.subr.mxu0 %v534
    %637 = vmatpush2.msra.mxu0 %v533
    %638 = vmatprep.mubr.f32.mxu0 %v572
    %639 = vmatmul.mubr.f32.gmra.mxu0 %v568
    %v640 = vpop.f32.mrf.mxu0
    %v641 = vadd.f32 0.0, %v640
    %v642 = vpop.f32.mrf.mxu0
    %v643 = vadd.f32 0.0, %v642
    %644 = vdwg.mxu0
    %p645 = scmp.eq.s32.totalorder 0, 0
    // Predicated region
    $region26: #{tpu_custom_call.1} parent=1 // pred_check
      %p646 = pneg %p645
    $region27: #{tpu_custom_call.1} parent=1 // pred_check_branch
      %648 = sbr.rel (%p646) target = $region29
    $region28: #{tpu_custom_call.1} parent=1 // pred_region
      %649 = vst [vmem:[#allocation8] sm:$0xff] %v641
      %650 = vst [vmem:[#allocation8 + $0x8] sm:$0xff] %v643
    $region29: #{tpu_custom_call.1} parent=1 // pred_fallthru
      _
    %p651 = scmp.ne.s32.totalorder 0, 0
    // Predicated region
    $region30: #{tpu_custom_call.1} parent=1 // pred_check
      %p652 = pneg %p651
    $region31: #{tpu_custom_call.1} parent=1 // pred_check_branch
      %654 = sbr.rel (%p652) target = $region33
    $region32: #{tpu_custom_call.1} parent=1 // pred_region
      %v655 = vld [vmem:[#allocation8] sm:$0xff]
      %v656 = vld [vmem:[#allocation8 + $0x8] sm:$0xff]
      %v657 = vadd.f32 %v655, %v641
      %v658 = vadd.f32 %v656, %v643
      %659 = vst [vmem:[#allocation8] sm:$0xff] %v657
      %660 = vst [vmem:[#allocation8 + $0x8] sm:$0xff] %v658
    $region33: #{tpu_custom_call.1} parent=1 // pred_fallthru
      _
    // Predicated region
    $region34: #{tpu_custom_call.1} parent=1 // pred_check
      _
    $region35: #{tpu_custom_call.1} parent=1 // pred_check_branch
      %662 = sbr.rel (0) target = $region37
    $region36: #{tpu_custom_call.1} parent=1 // pred_region
      %s664 = ssub.s32 256, 256
      %665 = vsyncadd [#allocation4], %s664
      %s667 = sshll.u32 [#allocation8], 4
      %s668 = int_to_ptr.vmem [resolvable:$true] %s667
      %670 = dma.vmem_to_hbm [thread:$0]  %s668, 256, %s3, [#allocation4]
    $region37: #{tpu_custom_call.1} parent=1 // pred_fallthru
      _
    // Predicated region
    $region38: #{tpu_custom_call.1} parent=1 // pred_check
      _
    $region39: #{tpu_custom_call.1} parent=1 // pred_check_branch
      %672 = sbr.rel (0) target = $region41
    $region40: #{tpu_custom_call.1} parent=1 // pred_region
      %673 = dma.done [#allocation4], 256
    $region41: #{tpu_custom_call.1} parent=1 // pred_fallthru
      _
    %674 = vsyncpa [#allocation3], 1
    %675 = vsyncpa [#allocation6], 1
    %676 = vsyncpa [#allocation4], 1

</llo_original>
